<compile_context>
chip_gen: v5e
topology: v5e:2x2
jax: 0.10.0
libtpu: 0.0.40
codegen_flags: <defaults>
</compile_context>

<pallas_src>
import functools

import jax
import jax.numpy as jnp
from jax.experimental import pallas as pl
from jax.experimental.pallas import tpu as pltpu

_LANE = 128
_SUB = 8
_DEFAULT_BLOCK_ROWS = 2048  # (2048, 128) f32 tile = 1 MiB per input per buffer


def _round_up(a, b):
    return (a + b - 1) // b * b


def _sq_err_kernel(x_ref, y_ref, out_ref, acc_ref, *,
                   rows, block_rows, num_blocks, inner, need_mask):
    p = pl.program_id(0)   # core-split ("parallel") axis
    i = pl.program_id(1)   # reduction ("arbitrary") axis

    @pl.when(i == 0)
    def _():
        acc_ref[...] = jnp.zeros_like(acc_ref)

    # Native-dtype tiles straight from HBM; per-tile upcast is VPU work hidden
    # under DMA in this memory-bound loop.
    d = x_ref[...].astype(jnp.float32) - y_ref[...].astype(jnp.float32)

    if need_mask:
        b = p * inner + i
        row0 = jnp.minimum(b, num_blocks - 1) * block_rows
        row_idx = row0 + jax.lax.broadcasted_iota(jnp.int32, d.shape, 0)
        valid = jnp.logical_and(row_idx < rows, b < num_blocks)
        d = jnp.where(valid, d, 0.0)

    # Pure elementwise accumulation — no per-step cross-lane reduce, no scalar
    # read-modify-write dependency.
    acc_ref[...] += d * d

    @pl.when(i == inner - 1)
    def _():
        # One partial reduce per core: fold (block_rows,128) -> (8,128),
        # lane-dense output slab; final sum + log10 happen in the wrapper.
        out_ref[...] = acc_ref[...].reshape(
            block_rows // _SUB, _SUB, _LANE).sum(axis=0)


def psnr_pallas(x, y, *, block_rows=_DEFAULT_BLOCK_ROWS):
    assert x.shape == y.shape, "input/target shape mismatch"
    n = x.size

    xf = jnp.ravel(x)
    yf = jnp.ravel(y)
    lane_pad = (-n) % _LANE
    if lane_pad:
        # Zero padding of *both* operands contributes 0 to the squared-error
        # sum; only needed when n is not a multiple of 128.
        xf = jnp.pad(xf, (0, lane_pad))
        yf = jnp.pad(yf, (0, lane_pad))
    rows = xf.size // _LANE
    x2 = xf.reshape(rows, _LANE)
    y2 = yf.reshape(rows, _LANE)

    block_rows = min(block_rows, _round_up(rows, _SUB))
    num_blocks = pl.cdiv(rows, block_rows)
    n_cores = 2 if num_blocks >= 2 else 1       # megacore split (helps v7x)
    inner = pl.cdiv(num_blocks, n_cores)
    need_mask = (rows % block_rows != 0) or (n_cores * inner != num_blocks)

    def in_map(p, i):
        b = p * inner + i
        if need_mask:
            b = jnp.minimum(b, num_blocks - 1)   # clamp over-run blocks
        return (b, 0)

    partials = pl.pallas_call(
        functools.partial(
            _sq_err_kernel, rows=rows, block_rows=block_rows,
            num_blocks=num_blocks, inner=inner, need_mask=need_mask),
        out_shape=jax.ShapeDtypeStruct((n_cores * _SUB, _LANE), jnp.float32),
        grid_spec=pltpu.PrefetchScalarGridSpec(
            num_scalar_prefetch=0,
            grid=(n_cores, inner),
            in_specs=[
                pl.BlockSpec((block_rows, _LANE), in_map),
                pl.BlockSpec((block_rows, _LANE), in_map),
            ],
            out_specs=pl.BlockSpec((_SUB, _LANE), lambda p, i: (p, 0)),
            scratch_shapes=[pltpu.VMEM((block_rows, _LANE), jnp.float32)],
        ),
        compiler_params=pltpu.CompilerParams(
            dimension_semantics=("parallel", "arbitrary")),
    )(x2, y2)

    mse = jnp.sum(partials) / n
    # -(20*log10(1) - 10*log10(mse)) == 10*log10(mse)
    return 10.0 * (jnp.log(mse) / jnp.log(10.0))


def psnr_reference(x, y):
    mse = jnp.mean((x.astype(jnp.float32) - y.astype(jnp.float32)) ** 2)
    return 10.0 * jnp.log10(mse)


if __name__ == "__main__":
    key = jax.random.PRNGKey(0)
    k1, k2 = jax.random.split(key)

    # NCHW, same convention as the PyTorch module.
    x = jax.random.uniform(k1, (2, 4, 16, 16), dtype=jnp.float32)
    y = jax.random.uniform(k2, (2, 4, 16, 16), dtype=jnp.float32)
    out = psnr_pallas(x, y)
    jax.block_until_ready(out)
    ref = psnr_reference(x, y)
    assert jnp.allclose(out, ref, atol=1e-4, rtol=1e-4), (out, ref)

    # Exercise multi-block, two-core split, lane padding and masked-tail path
    # (tiny block_rows forces several blocks) with native bf16 inputs.
    x3 = jax.random.uniform(k1, (2, 3, 20, 20), dtype=jnp.bfloat16)
    y3 = jax.random.uniform(k2, (2, 3, 20, 20), dtype=jnp.bfloat16)
    out3 = psnr_pallas(x3, y3, block_rows=8)
    jax.block_until_ready(out3)
    ref3 = psnr_reference(x3, y3)
    assert jnp.allclose(out3, ref3, atol=1e-3, rtol=1e-3), (out3, ref3)

    print("KERNEL_OK")
</pallas_src>

<mosaic_0001>
module attributes {stable_mosaic.version = 11 : i64} {
  func.func @_sq_err_kernel(%arg0: i32, %arg1: i32, %arg2: memref<16x128xf32, #tpu.memory_space<vmem>>, %arg3: memref<16x128xf32, #tpu.memory_space<vmem>>, %arg4: memref<8x128xf32, #tpu.memory_space<vmem>>, %arg5: memref<16x128xf32, #tpu.memory_space<vmem>>) attributes {dimension_semantics = [#tpu.dimension_semantics<parallel>, #tpu.dimension_semantics<arbitrary>], iteration_bounds = array<i64: 1, 1>, scalar_prefetch = 0 : i64, scratch_operands = 1 : i64, tpu.core_type = #tpu.core_type<tc>, window_params = [{transform_indices = @transform_0, window_bounds = array<i64: 16, 128>}, {transform_indices = @transform_1, window_bounds = array<i64: 16, 128>}, {transform_indices = @transform_2, window_bounds = array<i64: 8, 128>}]} {
    %c0_i32 = arith.constant 0 : i32
    %0 = arith.cmpi eq, %arg1, %c0_i32 : i32
    %1 = arith.extui %0 : i1 to i32
    %c0_i32_0 = arith.constant 0 : i32
    %2 = arith.cmpi ne, %1, %c0_i32_0 : i32
    scf.if %2 {
      %cst = arith.constant 0.000000e+00 : f32
      %13 = vector.broadcast %cst : f32 to vector<16x128xf32>
      %c0_10 = arith.constant 0 : index
      %c0_11 = arith.constant 0 : index
      %14 = vector.load %arg5[%c0_10, %c0_11] : memref<16x128xf32, #tpu.memory_space<vmem>>, vector<16x128xf32>
      tpu.vector_store %arg5[%c0_10, %c0_11], %13 {strides = array<i32>} : memref<16x128xf32, #tpu.memory_space<vmem>>, vector<16x128xf32>,
    } else {
    }
    %c0 = arith.constant 0 : index
    %c0_1 = arith.constant 0 : index
    %3 = vector.load %arg2[%c0, %c0_1] : memref<16x128xf32, #tpu.memory_space<vmem>>, vector<16x128xf32>
    %c0_2 = arith.constant 0 : index
    %c0_3 = arith.constant 0 : index
    %4 = vector.load %arg3[%c0_2, %c0_3] : memref<16x128xf32, #tpu.memory_space<vmem>>, vector<16x128xf32>
    %5 = arith.subf %3, %4 : vector<16x128xf32>
    %c0_4 = arith.constant 0 : index
    %c0_5 = arith.constant 0 : index
    %6 = vector.load %arg5[%c0_4, %c0_5] : memref<16x128xf32, #tpu.memory_space<vmem>>, vector<16x128xf32>
    %7 = arith.mulf %5, %5 : vector<16x128xf32>
    %8 = arith.addf %6, %7 : vector<16x128xf32>
    %c0_6 = arith.constant 0 : index
    %c0_7 = arith.constant 0 : index
    %9 = vector.load %arg5[%c0_6, %c0_7] : memref<16x128xf32, #tpu.memory_space<vmem>>, vector<16x128xf32>
    tpu.vector_store %arg5[%c0_6, %c0_7], %8 {strides = array<i32>} : memref<16x128xf32, #tpu.memory_space<vmem>>, vector<16x128xf32>,
    %c0_i32_8 = arith.constant 0 : i32
    %10 = arith.cmpi eq, %arg1, %c0_i32_8 : i32
    %11 = arith.extui %10 : i1 to i32
    %c0_i32_9 = arith.constant 0 : i32
    %12 = arith.cmpi ne, %11, %c0_i32_9 : i32
    scf.if %12 {
      %c0_10 = arith.constant 0 : index
      %c0_11 = arith.constant 0 : index
      %13 = vector.load %arg5[%c0_10, %c0_11] : memref<16x128xf32, #tpu.memory_space<vmem>>, vector<16x128xf32>
      %14 = vector.shape_cast %13 : vector<16x128xf32> to vector<2x8x128xf32>
      %cst = arith.constant dense<0.000000e+00> : vector<8x128xf32>
      %15 = vector.multi_reduction <add>, %14, %cst [0] : vector<2x8x128xf32> to vector<8x128xf32>
      %c0_12 = arith.constant 0 : index
      %c0_13 = arith.constant 0 : index
      %16 = vector.load %arg4[%c0_12, %c0_13] : memref<8x128xf32, #tpu.memory_space<vmem>>, vector<8x128xf32>
      tpu.vector_store %arg4[%c0_12, %c0_13], %15 {strides = array<i32>} : memref<8x128xf32, #tpu.memory_space<vmem>>, vector<8x128xf32>,
    } else {
    }
    return
  }
  func.func @transform_0(%arg0: i32, %arg1: i32) -> (i32, i32) {
    %c1_i32 = arith.constant 1 : i32
    %0 = arith.muli %arg0, %c1_i32 : i32
    %1 = arith.addi %0, %arg1 : i32
    %c0_i32 = arith.constant 0 : i32
    %c0_i32_0 = arith.constant 0 : i32
    return %1, %c0_i32 : i32, i32
  }
  func.func @transform_1(%arg0: i32, %arg1: i32) -> (i32, i32) {
    %c1_i32 = arith.constant 1 : i32
    %0 = arith.muli %arg0, %c1_i32 : i32
    %1 = arith.addi %0, %arg1 : i32
    %c0_i32 = arith.constant 0 : i32
    %c0_i32_0 = arith.constant 0 : i32
    return %1, %c0_i32 : i32, i32
  }
  func.func @transform_2(%arg0: i32, %arg1: i32) -> (i32, i32) {
    %c0_i32 = arith.constant 0 : i32
    %c0_i32_0 = arith.constant 0 : i32
    return %arg0, %c0_i32 : i32, i32
  }
}

</mosaic_0001>

<llo_original>
// kernel: tpu_custom_call.1
$region0: #{tpu_custom_call.1}
  #allocation0 [shape = 'u32[]', space=smem, size = 0x4, offset = 0x4, fixed_abs, tag = 'smem constant byte address 0x4 - core index']
  #allocation1 [shape = 'u32[72,128]{1,0:T(1,128)}', space=vmem, size = 0x9000, scoped, tag = 'internal scratch']
  #allocation2 [shape = 'f32[16,128]{1,0:T(8,128)}', space=vmem, size = 0x2000, scoped, tag = 'scratch operand']
  %s0 = inlined_call_operand.hbm [shape: f32[16,128], index: 0, kind: input, shape index: {}]
  %s1 = inlined_call_operand.hbm [shape: f32[16,128], index: 1, kind: input, shape index: {}]
  %s2 = inlined_call_operand.hbm [shape: f32[8,128], index: 2, kind: output, shape index: {}]
  %s3 = sld [smem:[#allocation0]]
  $region34: #{tpu_custom_call.1} parent=0
    _
  %s5 = ssub.s32 1, %s3
  %s6 = scalar_select 0, %s5, %s3
  $region1: #{tpu_custom_call.1} parent=0
    #allocation3 [shape = 'u8[8192]{0}', space=vmem, size = 0x2000, scoped, tag = 'input window, operand 0, single buffered']
    #allocation4 [shape = 's32[1]{0}', space=sflag, size = 0x4, scoped, tag = 'scoped memory for tpu_custom_call.1']
    #allocation5 [shape = 's32[1]{0}', space=sflag, size = 0x4, scoped, tag = 'scoped memory for tpu_custom_call.1']
    #allocation6 [shape = 'u8[8192]{0}', space=vmem, size = 0x2000, scoped, tag = 'input window, operand 1, single buffered']
    #allocation7 [shape = 's32[1]{0}', space=sflag, size = 0x4, scoped, tag = 'scoped memory for tpu_custom_call.1']
    #allocation8 [shape = 'u8[4096]{0}', space=vmem, size = 0x1000, scoped, tag = 'output window, operand 0, single buffered']
    %7 = vsyncpa [#allocation4], 0
    %8 = vsyncpa [#allocation7], 0
    %9 = vsyncpa [#allocation5], 0
    // Predicated region
    $region2: #{tpu_custom_call.1} parent=1 // pred_check
      _
    $region3: #{tpu_custom_call.1} parent=1 // pred_check_branch
      %11 = sbr.rel (0) target = $region5
    $region4: #{tpu_custom_call.1} parent=1 // pred_region
      %s12 = sadd.s32 0, 0
      %s13 = smul.u32 2, %s12
      %15 = vsyncadd [#allocation4], 0
      %s16 = smul.addr %s13, 8
      %s17 = scalar_lea.hbm %s0, %s16
      %s18 = sshll.u32 %s17, 4
      %s19 = int_to_ptr.hbm [resolvable:$true] %s18
      %s20 = sshll.u32 [#allocation3], 4
      %s21 = int_to_ptr.vmem [resolvable:$true] %s20
      %26 = dma.hbm_to_vmem [thread:$0]  %s19, 256, %s21, [#allocation4], 128, 128, 8
    $region5: #{tpu_custom_call.1} parent=1 // pred_fallthru
      _
    // Predicated region
    $region6: #{tpu_custom_call.1} parent=1 // pred_check
      _
    $region7: #{tpu_custom_call.1} parent=1 // pred_check_branch
      %28 = sbr.rel (0) target = $region9
    $region8: #{tpu_custom_call.1} parent=1 // pred_region
      %s29 = sadd.s32 0, 0
      %s30 = smul.u32 2, %s29
      %32 = vsyncadd [#allocation7], 0
      %s33 = smul.addr %s30, 8
      %s34 = scalar_lea.hbm %s1, %s33
      %s35 = sshll.u32 %s34, 4
      %s36 = int_to_ptr.hbm [resolvable:$true] %s35
      %s37 = sshll.u32 [#allocation6], 4
      %s38 = int_to_ptr.vmem [resolvable:$true] %s37
      %43 = dma.hbm_to_vmem [thread:$0]  %s36, 256, %s38, [#allocation7], 128, 128, 8
    $region9: #{tpu_custom_call.1} parent=1 // pred_fallthru
      _
    // Predicated region
    $region10: #{tpu_custom_call.1} parent=1 // pred_check
      _
    $region11: #{tpu_custom_call.1} parent=1 // pred_check_branch
      %45 = sbr.rel (0) target = $region13
    $region12: #{tpu_custom_call.1} parent=1 // pred_region
      %47 = dma.done [#allocation4], 256
    $region13: #{tpu_custom_call.1} parent=1 // pred_fallthru
      _
    // Predicated region
    $region14: #{tpu_custom_call.1} parent=1 // pred_check
      _
    $region15: #{tpu_custom_call.1} parent=1 // pred_check_branch
      %49 = sbr.rel (0) target = $region17
    $region16: #{tpu_custom_call.1} parent=1 // pred_region
      %51 = dma.done [#allocation7], 256
    $region17: #{tpu_custom_call.1} parent=1 // pred_fallthru
      _
    %s52 = sadd.s32 0, 0
    %s53 = smul.u32 2, %s52
    %s54 = sadd.s32 0, 0
    %s55 = smul.u32 2, %s54
    %p56 = scmp.eq.s32.totalorder 0, 0
    // Predicated region
    $region18: #{tpu_custom_call.1} parent=1 // pred_check
      %p57 = pneg %p56
    $region19: #{tpu_custom_call.1} parent=1 // pred_check_branch
      %59 = sbr.rel (%p57) target = $region21
    $region20: #{tpu_custom_call.1} parent=1 // pred_region
      %60 = vst [vmem:[#allocation2] sm:$0xff] 0.0
      %61 = vst [vmem:[#allocation2 + $0x8] sm:$0xff] 0.0
    $region21: #{tpu_custom_call.1} parent=1 // pred_fallthru
      _
    %v62 = vld [vmem:[#allocation3] sm:$0xff]
    %v63 = vld [vmem:[#allocation3 + $0x8] sm:$0xff]
    %v64 = vld [vmem:[#allocation6] sm:$0xff]
    %v65 = vld [vmem:[#allocation6 + $0x8] sm:$0xff]
    %v66 = vsub.f32 %v62, %v64
    %v67 = vsub.f32 %v63, %v65
    %v68 = vld [vmem:[#allocation2] sm:$0xff]
    %v69 = vld [vmem:[#allocation2 + $0x8] sm:$0xff]
    %v70 = vmul.f32 %v66, %v66
    %v71 = vmul.f32 %v67, %v67
    %v72 = vadd.f32 %v68, %v70
    %v73 = vadd.f32 %v69, %v71
    %74 = vst [vmem:[#allocation2] sm:$0xff] %v72
    %75 = vst [vmem:[#allocation2 + $0x8] sm:$0xff] %v73
    // Predicated region
    $region22: #{tpu_custom_call.1} parent=1 // pred_check
      %p76 = pneg %p56
    $region23: #{tpu_custom_call.1} parent=1 // pred_check_branch
      %78 = sbr.rel (%p76) target = $region25
    $region24: #{tpu_custom_call.1} parent=1 // pred_region
      %v79 = vld [vmem:[#allocation2] sm:$0xff]
      %v80 = vld [vmem:[#allocation2 + $0x8] sm:$0xff]
      %v81 = vadd.f32 %v79, %v80
      %82 = vst [vmem:[#allocation8] sm:$0xff] %v81
    $region25: #{tpu_custom_call.1} parent=1 // pred_fallthru
      _
    // Predicated region
    $region26: #{tpu_custom_call.1} parent=1 // pred_check
      _
    $region27: #{tpu_custom_call.1} parent=1 // pred_check_branch
      %84 = sbr.rel (0) target = $region29
    $region28: #{tpu_custom_call.1} parent=1 // pred_region
      %86 = vsyncadd [#allocation5], 0
      %s88 = sshll.u32 [#allocation8], 4
      %s89 = int_to_ptr.vmem [resolvable:$true] %s88
      %s90 = sshll.u32 %s2, 4
      %s91 = int_to_ptr.hbm [resolvable:$true] %s90
      %93 = dma.vmem_to_hbm [thread:$0]  %s89, 128, %s91, [#allocation5]
    $region29: #{tpu_custom_call.1} parent=1 // pred_fallthru
      _
    // Predicated region
    $region30: #{tpu_custom_call.1} parent=1 // pred_check
      _
    $region31: #{tpu_custom_call.1} parent=1 // pred_check_branch
      %95 = sbr.rel (0) target = $region33
    $region32: #{tpu_custom_call.1} parent=1 // pred_region
      %97 = dma.done [#allocation5], 128
    $region33: #{tpu_custom_call.1} parent=1 // pred_fallthru
      _
    %98 = vsyncpa [#allocation4], 1
    %99 = vsyncpa [#allocation7], 1
    %100 = vsyncpa [#allocation5], 1

</llo_original>
